<compile_context>
chip_gen: v7x
topology: tpu7x:2x2x1
jax: 0.10.0
libtpu: 0.0.40
codegen_flags: <defaults>
</compile_context>

<pallas_src>
import functools

import jax
import jax.numpy as jnp
from jax.experimental import pallas as pl
from jax.experimental.pallas import tpu as pltpu

_LANE = 128  # vreg lane width: last dim should be a multiple of this


def _round_up(x: int, m: int) -> int:
    return ((x + m - 1) // m) * m


def _cdiv(a: int, b: int) -> int:
    return (a + b - 1) // b


def _sublane(dtype) -> int:
    """Min second-to-last tile dim for this dtype: 8 f32, 16 bf16, 32 int8/fp8."""
    return max(8, 32 // jnp.dtype(dtype).itemsize)


def _vmem_ceiling_bytes() -> int:
    """Usable VMEM budget for this generation, with headroom for Mosaic scratch."""
    try:
        cap = int(pltpu.get_tpu_info().vmem_capacity_bytes)
    except Exception:
        cap = 64 << 20  # conservative (v7x-sized) fallback
    # Leave ~8 MiB / 10% for compiler internal scratch, semaphores, spills.
    return max(min(cap - (8 << 20), (cap * 9) // 10), 16 << 20)


_VMEM_CEIL = _vmem_ceiling_bytes()


def _resident_spec(shape):
    """BlockSpec for a grid-invariant (weight/bias) input.

    Same (0,0) block every grid step -> DMA'd once; request a single buffer so
    it doesn't occupy 2x its size in VMEM.  Returns (spec, buffer_count) so the
    VMEM accounting stays honest if the fallback path is taken.
    """
    try:
        return pl.BlockSpec(shape, lambda i: (0, 0),
                            pipeline_mode=pl.Buffered(1)), 1
    except TypeError:  # older BlockSpec without pipeline_mode kwarg
        return pl.BlockSpec(shape, lambda i: (0, 0)), 2


def _make_mlp_kernel(num_linears: int, act: str):
    """Fused MLP kernel: all matmuls + activations for one batch tile."""

    def kernel(*refs):
        x_ref = refs[0]
        out_ref = refs[-1]
        param_refs = refs[1:-1]  # (w0, b0, w1, b1, ..., w_{L-1}, b_{L-1})

        h = x_ref[...]
        for n in range(num_linears):
            w = param_refs[2 * n][...]
            b = param_refs[2 * n + 1][...]          # shape (1, out_n)
            # Feed the MXU in the native parameter dtype, accumulate in f32.
            h = jnp.dot(h.astype(w.dtype), w,
                        preferred_element_type=jnp.float32)
            h = h + b.astype(jnp.float32)
            if n < num_linears - 1:
                if act == "swish":
                    h = h * jax.nn.sigmoid(h)        # SiLU, f32 on VPU/EUP
                else:                                # "sin"
                    h = jnp.sin(h)
        out_ref[...] = h.astype(out_ref.dtype)

    return kernel


def init_mlp_params(key, num_layers, in_dim, hid_dim, out_dim, bias=True,
                    dtype=jnp.float32):
    """Deterministic parameter init matching the torch module's layer shapes."""
    hidden_shapes = [hid_dim] * num_layers
    dims = [in_dim] + hidden_shapes + [out_dim]
    params = []
    for n in range(len(dims) - 1):
        d_in, d_out = dims[n], dims[n + 1]
        key, kw, kb = jax.random.split(key, 3)
        bound = 1.0 / jnp.sqrt(jnp.float32(d_in))
        w = jax.random.uniform(kw, (d_in, d_out), dtype, -bound, bound)
        if bias:
            b = jax.random.uniform(kb, (1, d_out), dtype, -bound, bound)
        else:
            b = jnp.zeros((1, d_out), dtype)
        params.append((w, b))
    return params


@functools.partial(jax.jit, static_argnames=("act", "tile_m"))
def mlp_pallas(x, params, *, act="swish", tile_m=None):
    """Run the fused MLP Pallas kernel. x: (M, in_dim)."""
    if act not in ("swish", "sin"):
        raise NotImplementedError(f"Activation {act} not implemented.")

    M, in_dim = x.shape
    num_linears = len(params)
    out_dim = params[-1][0].shape[1]

    # ---- lane-dense zero padding of feature dims (exact: swish(0)=sin(0)=0) --
    dims = [in_dim] + [w.shape[1] for (w, _) in params]
    pdims = [_round_up(d, _LANE) for d in dims]
    # TODO(synk): pad feature dims to 256 on 256-wide-MXU generations when the
    # true dims are >= 256 (keeps both MXU halves fed per pass).

    # ---- batch tiling: dtype-aware sublane, balanced, >= 2 steps when possible
    sub = _sublane(x.dtype)
    if tile_m is None:
        # Larger batch tiles on 128-MiB-VMEM generations (v5e/v6e).
        tile_m = 512 if _VMEM_CEIL >= (100 << 20) else 256

    Mp_min = _round_up(M, sub)
    n_steps = max(_cdiv(Mp_min, min(tile_m, Mp_min)),
                  2 if Mp_min >= 2 * sub else 1)   # 2-TC (v7x) sharding
    tm = _round_up(_cdiv(Mp_min, n_steps), sub)    # balanced -> bounded padding
    Mp = tm * n_steps

    x_p = jnp.pad(x, ((0, Mp - M), (0, pdims[0] - in_dim)))

    flat_params = []
    in_specs = [pl.BlockSpec((tm, pdims[0]), lambda i: (i, 0))]
    par_bytes = 0
    for n, (w, b) in enumerate(params):
        d_in, d_out = w.shape
        w_p = jnp.pad(w, ((0, pdims[n] - d_in), (0, pdims[n + 1] - d_out)))
        b_p = jnp.pad(jnp.reshape(b, (1, d_out)),
                      ((0, 0), (0, pdims[n + 1] - d_out)))
        flat_params.extend([w_p, b_p])
        w_spec, nbuf = _resident_spec(w_p.shape)
        b_spec, _ = _resident_spec(b_p.shape)
        in_specs.append(w_spec)
        in_specs.append(b_spec)
        par_bytes += nbuf * (w_p.size + b_p.size) * w_p.dtype.itemsize

    # TODO(synk): for layers whose padded weight exceeds ~1/4 of the VMEM
    # budget (very wide hidden dims on v7x), stream weight K/N tiles via
    # memory_space=pl.ANY + pltpu.emit_pipeline instead of keeping the whole
    # weight resident.

    # VMEM budget: double-buffered activation tiles + single-buffered params +
    # f32 intermediates, with headroom; capped at the generation-aware ceiling.
    act_bytes = 2 * tm * (pdims[0] + pdims[-1]) * x.dtype.itemsize
    inter_bytes = 4 * tm * max(pdims) * 4
    need = int(1.25 * (act_bytes + par_bytes + inter_bytes)) + (4 << 20)
    vmem_limit = max(min(need, _VMEM_CEIL), min(32 << 20, _VMEM_CEIL))

    kernel = _make_mlp_kernel(num_linears, act)

    grid_spec = pltpu.PrefetchScalarGridSpec(
        num_scalar_prefetch=0,
        grid=(n_steps,),
        in_specs=in_specs,
        out_specs=pl.BlockSpec((tm, pdims[-1]), lambda i: (i, 0)),
    )

    out_p = pl.pallas_call(
        kernel,
        out_shape=jax.ShapeDtypeStruct((Mp, pdims[-1]), x.dtype),
        grid_spec=grid_spec,
        compiler_params=pltpu.CompilerParams(
            dimension_semantics=("parallel",),   # batch axis shards across TCs
            vmem_limit_bytes=vmem_limit),
    )(x_p, *flat_params)

    # Strip batch / lane padding back to the logical shape.
    return out_p[:M, :out_dim]


def mlp_ref(x, params, act="swish"):
    """Pure-JAX reference matching the torch forward pass."""
    h = x.astype(jnp.float32)
    for n, (w, b) in enumerate(params):
        h = h @ w.astype(jnp.float32) + b.astype(jnp.float32)
        if n < len(params) - 1:
            if act == "swish":
                h = h * jax.nn.sigmoid(h)
            else:
                h = jnp.sin(h)
    return h.astype(x.dtype)


if __name__ == "__main__":
    key = jax.random.PRNGKey(0)

    # Small shapes consistent with the module's forward: x is (batch, in_dim).
    num_layers, in_dim, hid_dim, out_dim = 2, 16, 32, 8
    batch = 16

    k_x, k_p = jax.random.split(key)
    x = jax.random.normal(k_x, (batch, in_dim), jnp.float32)
    params = init_mlp_params(k_p, num_layers, in_dim, hid_dim, out_dim, bias=True)

    out = jax.block_until_ready(mlp_pallas(x, params, act="swish"))
    ref = mlp_ref(x, params, act="swish")
    assert out.shape == (batch, out_dim)
    assert jnp.allclose(out, ref, atol=1e-5, rtol=1e-5), "swish mismatch vs reference"

    # Also exercise the 'sin' activation path once.
    out_sin = jax.block_until_ready(mlp_pallas(x, params, act="sin"))
    ref_sin = mlp_ref(x, params, act="sin")
    assert jnp.allclose(out_sin, ref_sin, atol=1e-5, rtol=1e-5), "sin mismatch vs reference"

    print("KERNEL_OK")
</pallas_src>

<mosaic_0001>
module attributes {stable_mosaic.version = 11 : i64} {
  func.func @kernel(%arg0: i32, %arg1: memref<8x128xf32, #tpu.memory_space<vmem>>, %arg2: memref<128x128xf32, #tpu.memory_space<vmem>>, %arg3: memref<1x128xf32, #tpu.memory_space<vmem>>, %arg4: memref<128x128xf32, #tpu.memory_space<vmem>>, %arg5: memref<1x128xf32, #tpu.memory_space<vmem>>, %arg6: memref<128x128xf32, #tpu.memory_space<vmem>>, %arg7: memref<1x128xf32, #tpu.memory_space<vmem>>, %arg8: memref<8x128xf32, #tpu.memory_space<vmem>>) attributes {dimension_semantics = [#tpu.dimension_semantics<parallel>], iteration_bounds = array<i64: 2>, scalar_prefetch = 0 : i64, scratch_operands = 0 : i64, tpu.core_type = #tpu.core_type<tc>, window_params = [{transform_indices = @transform_0, window_bounds = array<i64: 8, 128>}, {pipeline_mode = #tpu.pipeline_mode<synchronous>, transform_indices = @transform_1, window_bounds = array<i64: 128, 128>}, {pipeline_mode = #tpu.pipeline_mode<synchronous>, transform_indices = @transform_2, window_bounds = array<i64: 1, 128>}, {pipeline_mode = #tpu.pipeline_mode<synchronous>, transform_indices = @transform_3, window_bounds = array<i64: 128, 128>}, {pipeline_mode = #tpu.pipeline_mode<synchronous>, transform_indices = @transform_4, window_bounds = array<i64: 1, 128>}, {pipeline_mode = #tpu.pipeline_mode<synchronous>, transform_indices = @transform_5, window_bounds = array<i64: 128, 128>}, {pipeline_mode = #tpu.pipeline_mode<synchronous>, transform_indices = @transform_6, window_bounds = array<i64: 1, 128>}, {transform_indices = @transform_7, window_bounds = array<i64: 8, 128>}]} {
    %c0 = arith.constant 0 : index
    %c0_0 = arith.constant 0 : index
    %0 = vector.load %arg1[%c0, %c0_0] : memref<8x128xf32, #tpu.memory_space<vmem>>, vector<8x128xf32>
    %c0_1 = arith.constant 0 : index
    %c0_2 = arith.constant 0 : index
    %1 = vector.load %arg2[%c0_1, %c0_2] : memref<128x128xf32, #tpu.memory_space<vmem>>, vector<128x128xf32>
    %c0_3 = arith.constant 0 : index
    %c0_4 = arith.constant 0 : index
    %2 = vector.load %arg3[%c0_3, %c0_4] : memref<1x128xf32, #tpu.memory_space<vmem>>, vector<1x128xf32>
    %cst = arith.constant dense<0.000000e+00> : vector<8x128xf32>
    %3 = tpu.matmul %0, %1, %cst {dimension_numbers = #tpu.dot_dimension_numbers<[1], [0], [0], [1], [0, 0, 1, 1], [], []>} : vector<8x128xf32>, vector<128x128xf32>, vector<8x128xf32> -> vector<8x128xf32>
    %4 = vector.broadcast %2 : vector<1x128xf32> to vector<8x128xf32>
    %5 = arith.addf %3, %4 : vector<8x128xf32>
    %6 = arith.negf %5 : vector<8x128xf32>
    %7 = math.exp %6 : vector<8x128xf32>
    %cst_5 = arith.constant 1.000000e+00 : f32
    %8 = vector.broadcast %cst_5 : f32 to vector<8x128xf32>
    %9 = arith.addf %8, %7 : vector<8x128xf32>
    %10 = arith.divf %8, %9 : vector<8x128xf32>
    %11 = arith.mulf %5, %10 : vector<8x128xf32>
    %c0_6 = arith.constant 0 : index
    %c0_7 = arith.constant 0 : index
    %12 = vector.load %arg4[%c0_6, %c0_7] : memref<128x128xf32, #tpu.memory_space<vmem>>, vector<128x128xf32>
    %c0_8 = arith.constant 0 : index
    %c0_9 = arith.constant 0 : index
    %13 = vector.load %arg5[%c0_8, %c0_9] : memref<1x128xf32, #tpu.memory_space<vmem>>, vector<1x128xf32>
    %cst_10 = arith.constant dense<0.000000e+00> : vector<8x128xf32>
    %14 = tpu.matmul %11, %12, %cst_10 {dimension_numbers = #tpu.dot_dimension_numbers<[1], [0], [0], [1], [0, 0, 1, 1], [], []>} : vector<8x128xf32>, vector<128x128xf32>, vector<8x128xf32> -> vector<8x128xf32>
    %15 = vector.broadcast %13 : vector<1x128xf32> to vector<8x128xf32>
    %16 = arith.addf %14, %15 : vector<8x128xf32>
    %17 = arith.negf %16 : vector<8x128xf32>
    %18 = math.exp %17 : vector<8x128xf32>
    %cst_11 = arith.constant 1.000000e+00 : f32
    %19 = vector.broadcast %cst_11 : f32 to vector<8x128xf32>
    %20 = arith.addf %19, %18 : vector<8x128xf32>
    %21 = arith.divf %19, %20 : vector<8x128xf32>
    %22 = arith.mulf %16, %21 : vector<8x128xf32>
    %c0_12 = arith.constant 0 : index
    %c0_13 = arith.constant 0 : index
    %23 = vector.load %arg6[%c0_12, %c0_13] : memref<128x128xf32, #tpu.memory_space<vmem>>, vector<128x128xf32>
    %c0_14 = arith.constant 0 : index
    %c0_15 = arith.constant 0 : index
    %24 = vector.load %arg7[%c0_14, %c0_15] : memref<1x128xf32, #tpu.memory_space<vmem>>, vector<1x128xf32>
    %cst_16 = arith.constant dense<0.000000e+00> : vector<8x128xf32>
    %25 = tpu.matmul %22, %23, %cst_16 {dimension_numbers = #tpu.dot_dimension_numbers<[1], [0], [0], [1], [0, 0, 1, 1], [], []>} : vector<8x128xf32>, vector<128x128xf32>, vector<8x128xf32> -> vector<8x128xf32>
    %26 = vector.broadcast %24 : vector<1x128xf32> to vector<8x128xf32>
    %27 = arith.addf %25, %26 : vector<8x128xf32>
    %c0_17 = arith.constant 0 : index
    %c0_18 = arith.constant 0 : index
    %28 = vector.load %arg8[%c0_17, %c0_18] : memref<8x128xf32, #tpu.memory_space<vmem>>, vector<8x128xf32>
    tpu.vector_store %arg8[%c0_17, %c0_18], %27 {strides = array<i32>} : memref<8x128xf32, #tpu.memory_space<vmem>>, vector<8x128xf32>,
    return
  }
  func.func @transform_0(%arg0: i32) -> (i32, i32) {
    %c0_i32 = arith.constant 0 : i32
    %c0_i32_0 = arith.constant 0 : i32
    return %arg0, %c0_i32 : i32, i32
  }
  func.func @transform_1(%arg0: i32) -> (i32, i32) {
    %c0_i32 = arith.constant 0 : i32
    %c0_i32_0 = arith.constant 0 : i32
    %c0_i32_1 = arith.constant 0 : i32
    return %c0_i32, %c0_i32_0 : i32, i32
  }
  func.func @transform_2(%arg0: i32) -> (i32, i32) {
    %c0_i32 = arith.constant 0 : i32
    %c0_i32_0 = arith.constant 0 : i32
    %c0_i32_1 = arith.constant 0 : i32
    return %c0_i32, %c0_i32_0 : i32, i32
  }
  func.func @transform_3(%arg0: i32) -> (i32, i32) {
    %c0_i32 = arith.constant 0 : i32
    %c0_i32_0 = arith.constant 0 : i32
    %c0_i32_1 = arith.constant 0 : i32
    return %c0_i32, %c0_i32_0 : i32, i32
  }
  func.func @transform_4(%arg0: i32) -> (i32, i32) {
    %c0_i32 = arith.constant 0 : i32
    %c0_i32_0 = arith.constant 0 : i32
    %c0_i32_1 = arith.constant 0 : i32
    return %c0_i32, %c0_i32_0 : i32, i32
  }
  func.func @transform_5(%arg0: i32) -> (i32, i32) {
    %c0_i32 = arith.constant 0 : i32
    %c0_i32_0 = arith.constant 0 : i32
    %c0_i32_1 = arith.constant 0 : i32
    return %c0_i32, %c0_i32_0 : i32, i32
  }
  func.func @transform_6(%arg0: i32) -> (i32, i32) {
    %c0_i32 = arith.constant 0 : i32
    %c0_i32_0 = arith.constant 0 : i32
    %c0_i32_1 = arith.constant 0 : i32
    return %c0_i32, %c0_i32_0 : i32, i32
  }
  func.func @transform_7(%arg0: i32) -> (i32, i32) {
    %c0_i32 = arith.constant 0 : i32
    %c0_i32_0 = arith.constant 0 : i32
    return %arg0, %c0_i32 : i32, i32
  }
}

</mosaic_0001>

<llo_original>
// kernel: mlp_pallas.1
$region0: #{mlp_pallas.1}
  #allocation0 [shape = 'u32[]', space=smem, size = 0x4, offset = 0x4, fixed_abs, tag = 'smem constant byte address 0x4 - core index']
  #allocation1 [shape = 'u32[144,128]{1,0:T(1,128)}', space=vmem, size = 0x12000, scoped, tag = 'internal scratch']
  %s0 = inlined_call_operand.vmem [shape: f32[16,128], index: 0, kind: input, shape index: {}]
  %s1 = inlined_call_operand.vmem [shape: f32[128,128], index: 1, kind: input, shape index: {}]
  %s2 = inlined_call_operand.vmem [shape: f32[1,128], index: 2, kind: input, shape index: {}]
  %s3 = inlined_call_operand.vmem [shape: f32[128,128], index: 3, kind: input, shape index: {}]
  %s4 = inlined_call_operand.vmem [shape: f32[1,128], index: 4, kind: input, shape index: {}]
  %s5 = inlined_call_operand.vmem [shape: f32[128,128], index: 5, kind: input, shape index: {}]
  %s6 = inlined_call_operand.vmem [shape: f32[1,128], index: 6, kind: input, shape index: {}]
  %s7 = inlined_call_operand.vmem [shape: f32[16,128], index: 7, kind: output, shape index: {}]
  %s8 = sld [smem:[#allocation0]]
  $region61: #{mlp_pallas.1} parent=0
    _
  %s10 = ssub.s32 1, %s8
  %s11 = scalar_select 0, %s10, %s8
  loop: start=0, step=1, limit=4
  $region2: #{mlp_pallas.1} parent=0 // loop_pre_header
    _
  $region3: #{mlp_pallas.1} parent=0 // loop_header
    %s13 = sphi 0, %s17
    %p14 = scmp.ge.s32.totalorder %s13, 4
    %s23 = sphi 0, %s25
    %s26 = sphi 0, %s23
    %s27 = sphi 0, %s26
    %s43 = sphi 0, %s27
    %s47 = sphi 0, %s47
    %s49 = sphi 0, %s47
    %s50 = sphi 0, %s49
    %s64 = sphi 0, %s50
    %s68 = sphi 0, %s68
    %s70 = sphi 0, %s68
    %s71 = sphi 0, %s70
    %s85 = sphi 0, %s71
    %s89 = sphi 0, %s89
    %s91 = sphi 0, %s89
    %s92 = sphi 0, %s91
    %s106 = sphi 0, %s92
    %s110 = sphi 0, %s110
    %s112 = sphi 0, %s110
    %s113 = sphi 0, %s112
    %s127 = sphi 0, %s113
    %s131 = sphi 0, %s131
    %s133 = sphi 0, %s131
    %s134 = sphi 0, %s133
    %s148 = sphi 0, %s134
    %s152 = sphi 0, %s152
    %s154 = sphi 0, %s152
    %s155 = sphi 0, %s154
    %s169 = sphi 0, %s155
    %s175 = sphi 0, %s177
    %s178 = sphi 0, %s175
    %s179 = sphi 0, %s178
    %s195 = sphi 0, %s179
  $region4: #{mlp_pallas.1} parent=0 // loop_header_branch
    %16 = sbr.rel (%p14) target = $region8
  $region5: #{mlp_pallas.1} parent=0 // loop_body
    %s18 = ssub.s32 %s13, 1
    %s19 = ssub.s32 %s13, 2
    %s20 = sadd.s32 %s13, 1
    %s21 = ssub.s32 %s13, %s20
    %p22 = scmp.eq.s32.totalorder %s21, 0
    %s24 = sadd.s32 %s23, 1
    %s25 = scalar_select %p22, %s23, %s24
    %p28 = pneg %p22
    %p29 = scmp.eq.s32.totalorder %s13, 1
    %p30 = por %p28, %p29
    %p31 = scmp.ne.s32.totalorder %s23, %s26
    %p32 = scmp.eq.s32.totalorder %s13, 0
    %p33 = por %p31, %p32
    %p34 = scmp.ne.s32.totalorder %s23, %s26
    %p35 = scmp.eq.s32.totalorder %s18, 1
    %p36 = por %p34, %p35
    %p37 = scmp.ne.s32.totalorder %s26, %s27
    %p38 = scmp.eq.s32.totalorder %s18, 0
    %p39 = por %p37, %p38
    %p40 = scmp.ne.s32.totalorder %s26, %s27
    %p41 = scmp.eq.s32.totalorder %s19, 1
    %p42 = por %p40, %p41
    %p44 = scmp.ne.s32.totalorder %s27, %s43
    %p45 = scmp.eq.s32.totalorder %s19, 0
    %p46 = por %p44, %p45
    %s48 = sadd.s32 %s47, 1
    %p51 = scmp.eq.s32.totalorder %s13, 1
    %p52 = scmp.ne.s32.totalorder %s47, %s49
    %p53 = scmp.eq.s32.totalorder %s13, 0
    %p54 = por %p52, %p53
    %p55 = scmp.ne.s32.totalorder %s47, %s49
    %p56 = scmp.eq.s32.totalorder %s18, 1
    %p57 = por %p55, %p56
    %p58 = scmp.ne.s32.totalorder %s49, %s50
    %p59 = scmp.eq.s32.totalorder %s18, 0
    %p60 = por %p58, %p59
    %p61 = scmp.ne.s32.totalorder %s49, %s50
    %p62 = scmp.eq.s32.totalorder %s19, 1
    %p63 = por %p61, %p62
    %p65 = scmp.ne.s32.totalorder %s50, %s64
    %p66 = scmp.eq.s32.totalorder %s19, 0
    %p67 = por %p65, %p66
    %s69 = sadd.s32 %s68, 1
    %p72 = scmp.eq.s32.totalorder %s13, 1
    %p73 = scmp.ne.s32.totalorder %s68, %s70
    %p74 = scmp.eq.s32.totalorder %s13, 0
    %p75 = por %p73, %p74
    %p76 = scmp.ne.s32.totalorder %s68, %s70
    %p77 = scmp.eq.s32.totalorder %s18, 1
    %p78 = por %p76, %p77
    %p79 = scmp.ne.s32.totalorder %s70, %s71
    %p80 = scmp.eq.s32.totalorder %s18, 0
    %p81 = por %p79, %p80
    %p82 = scmp.ne.s32.totalorder %s70, %s71
    %p83 = scmp.eq.s32.totalorder %s19, 1
    %p84 = por %p82, %p83
    %p86 = scmp.ne.s32.totalorder %s71, %s85
    %p87 = scmp.eq.s32.totalorder %s19, 0
    %p88 = por %p86, %p87
    %s90 = sadd.s32 %s89, 1
    %p93 = scmp.eq.s32.totalorder %s13, 1
    %p94 = scmp.ne.s32.totalorder %s89, %s91
    %p95 = scmp.eq.s32.totalorder %s13, 0
    %p96 = por %p94, %p95
    %p97 = scmp.ne.s32.totalorder %s89, %s91
    %p98 = scmp.eq.s32.totalorder %s18, 1
    %p99 = por %p97, %p98
    %p100 = scmp.ne.s32.totalorder %s91, %s92
    %p101 = scmp.eq.s32.totalorder %s18, 0
    %p102 = por %p100, %p101
    %p103 = scmp.ne.s32.totalorder %s91, %s92
    %p104 = scmp.eq.s32.totalorder %s19, 1
    %p105 = por %p103, %p104
    %p107 = scmp.ne.s32.totalorder %s92, %s106
    %p108 = scmp.eq.s32.totalorder %s19, 0
    %p109 = por %p107, %p108
    %s111 = sadd.s32 %s110, 1
    %p114 = scmp.eq.s32.totalorder %s13, 1
    %p115 = scmp.ne.s32.totalorder %s110, %s112
    %p116 = scmp.eq.s32.totalorder %s13, 0
    %p117 = por %p115, %p116
    %p118 = scmp.ne.s32.totalorder %s110, %s112
    %p119 = scmp.eq.s32.totalorder %s18, 1
    %p120 = por %p118, %p119
    %p121 = scmp.ne.s32.totalorder %s112, %s113
    %p122 = scmp.eq.s32.totalorder %s18, 0
    %p123 = por %p121, %p122
    %p124 = scmp.ne.s32.totalorder %s112, %s113
    %p125 = scmp.eq.s32.totalorder %s19, 1
    %p126 = por %p124, %p125
    %p128 = scmp.ne.s32.totalorder %s113, %s127
    %p129 = scmp.eq.s32.totalorder %s19, 0
    %p130 = por %p128, %p129
    %s132 = sadd.s32 %s131, 1
    %p135 = scmp.eq.s32.totalorder %s13, 1
    %p136 = scmp.ne.s32.totalorder %s131, %s133
    %p137 = scmp.eq.s32.totalorder %s13, 0
    %p138 = por %p136, %p137
    %p139 = scmp.ne.s32.totalorder %s131, %s133
    %p140 = scmp.eq.s32.totalorder %s18, 1
    %p141 = por %p139, %p140
    %p142 = scmp.ne.s32.totalorder %s133, %s134
    %p143 = scmp.eq.s32.totalorder %s18, 0
    %p144 = por %p142, %p143
    %p145 = scmp.ne.s32.totalorder %s133, %s134
    %p146 = scmp.eq.s32.totalorder %s19, 1
    %p147 = por %p145, %p146
    %p149 = scmp.ne.s32.totalorder %s134, %s148
    %p150 = scmp.eq.s32.totalorder %s19, 0
    %p151 = por %p149, %p150
    %s153 = sadd.s32 %s152, 1
    %p156 = scmp.eq.s32.totalorder %s13, 1
    %p157 = scmp.ne.s32.totalorder %s152, %s154
    %p158 = scmp.eq.s32.totalorder %s13, 0
    %p159 = por %p157, %p158
    %p160 = scmp.ne.s32.totalorder %s152, %s154
    %p161 = scmp.eq.s32.totalorder %s18, 1
    %p162 = por %p160, %p161
    %p163 = scmp.ne.s32.totalorder %s154, %s155
    %p164 = scmp.eq.s32.totalorder %s18, 0
    %p165 = por %p163, %p164
    %p166 = scmp.ne.s32.totalorder %s154, %s155
    %p167 = scmp.eq.s32.totalorder %s19, 1
    %p168 = por %p166, %p167
    %p170 = scmp.ne.s32.totalorder %s155, %s169
    %p171 = scmp.eq.s32.totalorder %s19, 0
    %p172 = por %p170, %p171
    %s173 = ssub.s32 %s13, %s20
    %p174 = scmp.eq.s32.totalorder %s173, 0
    %s176 = sadd.s32 %s175, 1
    %s177 = scalar_select %p174, %s175, %s176
    %p180 = pneg %p174
    %p181 = scmp.eq.s32.totalorder %s13, 1
    %p182 = por %p180, %p181
    %p183 = scmp.ne.s32.totalorder %s175, %s178
    %p184 = scmp.eq.s32.totalorder %s13, 0
    %p185 = por %p183, %p184
    %p186 = scmp.ne.s32.totalorder %s175, %s178
    %p187 = scmp.eq.s32.totalorder %s18, 1
    %p188 = por %p186, %p187
    %p189 = scmp.ne.s32.totalorder %s178, %s179
    %p190 = scmp.eq.s32.totalorder %s18, 0
    %p191 = por %p189, %p190
    %p192 = scmp.ne.s32.totalorder %s178, %s179
    %p193 = scmp.eq.s32.totalorder %s19, 1
    %p194 = por %p192, %p193
    %p196 = scmp.ne.s32.totalorder %s179, %s195
    %p197 = scmp.eq.s32.totalorder %s19, 0
    %p198 = por %p196, %p197
    %p199 = scmp.le.s32.totalorder 1, %s13
    %p200 = scmp.lt.s32.totalorder %s13, 3
    %p201 = pnand %p199, %p200
    %p202 = pneg %p201
    // Predicated region
    $region9: #{mlp_pallas.1} parent=5 // pred_check
      _
    $region10: #{mlp_pallas.1} parent=5 // pred_check_branch
      %204 = sbr.rel (%p201) target = $region12
    $region11: #{mlp_pallas.1} parent=5 // pred_region
      %s205 = ssub.s32 %s13, 1
      // Predicated region
      $region13: #{mlp_pallas.1} parent=11 // pred_check
        %p206 = pneg %p60
      $region14: #{mlp_pallas.1} parent=11 // pred_check_branch
        %208 = sbr.rel (%p206) target = $region16
      $region15: #{mlp_pallas.1} parent=11 // pred_region
        _
      $region16: #{mlp_pallas.1} parent=11 // pred_fallthru
        _
      // Predicated region
      $region17: #{mlp_pallas.1} parent=11 // pred_check
        %p209 = pneg %p81
      $region18: #{mlp_pallas.1} parent=11 // pred_check_branch
        %211 = sbr.rel (%p209) target = $region20
      $region19: #{mlp_pallas.1} parent=11 // pred_region
        _
      $region20: #{mlp_pallas.1} parent=11 // pred_fallthru
        _
      // Predicated region
      $region21: #{mlp_pallas.1} parent=11 // pred_check
        %p212 = pneg %p102
      $region22: #{mlp_pallas.1} parent=11 // pred_check_branch
        %214 = sbr.rel (%p212) target = $region24
      $region23: #{mlp_pallas.1} parent=11 // pred_region
        _
      $region24: #{mlp_pallas.1} parent=11 // pred_fallthru
        _
      // Predicated region
      $region25: #{mlp_pallas.1} parent=11 // pred_check
        %p215 = pneg %p123
      $region26: #{mlp_pallas.1} parent=11 // pred_check_branch
        %217 = sbr.rel (%p215) target = $region28
      $region27: #{mlp_pallas.1} parent=11 // pred_region
        _
      $region28: #{mlp_pallas.1} parent=11 // pred_fallthru
        _
      // Predicated region
      $region29: #{mlp_pallas.1} parent=11 // pred_check
        %p218 = pneg %p144
      $region30: #{mlp_pallas.1} parent=11 // pred_check_branch
        %220 = sbr.rel (%p218) target = $region32
      $region31: #{mlp_pallas.1} parent=11 // pred_region
        _
      $region32: #{mlp_pallas.1} parent=11 // pred_fallthru
        _
      // Predicated region
      $region33: #{mlp_pallas.1} parent=11 // pred_check
        %p221 = pneg %p165
      $region34: #{mlp_pallas.1} parent=11 // pred_check_branch
        %223 = sbr.rel (%p221) target = $region36
      $region35: #{mlp_pallas.1} parent=11 // pred_region
        _
      $region36: #{mlp_pallas.1} parent=11 // pred_fallthru
        _
    $region12: #{mlp_pallas.1} parent=5 // pred_fallthru
      _
    %p224 = scmp.lt.s32.totalorder %s13, 2
    // Predicated region
    $region37: #{mlp_pallas.1} parent=5 // pred_check
      %p225 = pneg %p224
    $region38: #{mlp_pallas.1} parent=5 // pred_check_branch
      %227 = sbr.rel (%p225) target = $region40
    $region39: #{mlp_pallas.1} parent=5 // pred_region
      // Predicated region
      $region41: #{mlp_pallas.1} parent=39 // pred_check
        %p228 = pneg %p33
      $region42: #{mlp_pallas.1} parent=39 // pred_check_branch
        %230 = sbr.rel (%p228) target = $region44
      $region43: #{mlp_pallas.1} parent=39 // pred_region
        %p231 = scmp.lt.s32.totalorder %s13, 1
        %s232 = scalar_select %p231, %s13, 1
        %s233 = smul.addr %s232, 8
        %s234 = scalar_lea.vmem %s0, %s233
      $region44: #{mlp_pallas.1} parent=39 // pred_fallthru
        _
    $region40: #{mlp_pallas.1} parent=5 // pred_fallthru
      _
    %p235 = scmp.le.s32.totalorder 1, %s13
    %p236 = scmp.lt.s32.totalorder %s13, 3
    %p237 = pnand %p235, %p236
    %p238 = pneg %p237
    // Predicated region
    $region45: #{mlp_pallas.1} parent=5 // pred_check
      _
    $region46: #{mlp_pallas.1} parent=5 // pred_check_branch
      %240 = sbr.rel (%p237) target = $region48
    $region47: #{mlp_pallas.1} parent=5 // pred_region
      %s241 = ssub.s32 %s13, 1
      %p242 = scmp.lt.s32.totalorder %s18, 1
      %s243 = scalar_select %p242, %s18, 1
      %s244 = smul.addr %s243, 8
      %s245 = scalar_lea.vmem %s0, %s244
      %p246 = pneg %p39
      %p247 = pneg %p36
      %p248 = pneg %p60
      %p249 = pneg %p57
      %p250 = pneg %p81
      %p251 = pneg %p78
      %p252 = pneg %p102
      %p253 = pneg %p99
      %p254 = pneg %p123
      %p255 = pneg %p120
      %p256 = pneg %p144
      %p257 = pneg %p141
      %p258 = pneg %p165
      %p259 = pneg %p162
      %p260 = pneg %p191
      %p261 = pneg %p188
      %p262 = scmp.lt.s32.totalorder %s18, 1
      %s263 = scalar_select %p262, %s18, 1
      %s264 = smul.addr %s263, 8
      %s265 = scalar_lea.vmem %s7, %s264
      %p266 = scmp.lt.s32.totalorder %s18, 1
      %s267 = scalar_select %p266, %s18, 1
      %s268 = smul.addr %s267, 8
      %s269 = scalar_lea.vmem %s0, %s268
      %p270 = scmp.lt.s32.totalorder %s18, 1
      %s271 = scalar_select %p270, %s18, 1
      %s272 = smul.addr %s271, 8
      %s273 = scalar_lea.vmem %s7, %s272
      %v274 = vld [vmem:[%s269] sm:$0xff]
      %v275 = vld [vmem:[%s1] sm:$0xff]
      %v276 = vld [vmem:[%s1 + $0x8] sm:$0xff]
      %v277 = vld [vmem:[%s1 + $0x10] sm:$0xff]
      %v278 = vld [vmem:[%s1 + $0x18] sm:$0xff]
      %v279 = vld [vmem:[%s1 + $0x20] sm:$0xff]
      %v280 = vld [vmem:[%s1 + $0x28] sm:$0xff]
      %v281 = vld [vmem:[%s1 + $0x30] sm:$0xff]
      %v282 = vld [vmem:[%s1 + $0x38] sm:$0xff]
      %v283 = vld [vmem:[%s1 + $0x40] sm:$0xff]
      %v284 = vld [vmem:[%s1 + $0x48] sm:$0xff]
      %v285 = vld [vmem:[%s1 + $0x50] sm:$0xff]
      %v286 = vld [vmem:[%s1 + $0x58] sm:$0xff]
      %v287 = vld [vmem:[%s1 + $0x60] sm:$0xff]
      %v288 = vld [vmem:[%s1 + $0x68] sm:$0xff]
      %v289 = vld [vmem:[%s1 + $0x70] sm:$0xff]
      %v290 = vld [vmem:[%s1 + $0x78] sm:$0xff]
      %v291 = vld [vmem:[%s2] sm:$0x1]
      %v293 = vlaneseq
      %v294 = vshrl.u32 %v293, 7
      %v295 = vsub.s32 0, %v294
      %v296 = vrot.slane %v291, %v295
      %298 = vmatprep.subr.mxu0 0.0
      %299 = vmatpush1.msra.mxu0 %v275
      %300 = vmatprep.subr.mxu0 0.0
      %301 = vmatpush1.msra.mxu0 %v276
      %302 = vmatprep.subr.mxu0 0.0
      %303 = vmatpush1.msra.mxu0 %v277
      %304 = vmatprep.subr.mxu0 0.0
      %305 = vmatpush1.msra.mxu0 %v278
      %306 = vmatprep.subr.mxu0 0.0
      %307 = vmatpush1.msra.mxu0 %v279
      %308 = vmatprep.subr.mxu0 0.0
      %309 = vmatpush1.msra.mxu0 %v280
      %310 = vmatprep.subr.mxu0 0.0
      %311 = vmatpush1.msra.mxu0 %v281
      %312 = vmatprep.subr.mxu0 0.0
      %313 = vmatpush1.msra.mxu0 %v282
      %314 = vmatprep.subr.mxu0 0.0
      %315 = vmatpush1.msra.mxu0 %v283
      %316 = vmatprep.subr.mxu0 0.0
      %317 = vmatpush1.msra.mxu0 %v284
      %318 = vmatprep.subr.mxu0 0.0
      %319 = vmatpush1.msra.mxu0 %v285
      %320 = vmatprep.subr.mxu0 0.0
      %321 = vmatpush1.msra.mxu0 %v286
      %322 = vmatprep.subr.mxu0 0.0
      %323 = vmatpush1.msra.mxu0 %v287
      %324 = vmatprep.subr.mxu0 0.0
      %325 = vmatpush1.msra.mxu0 %v288
      %326 = vmatprep.subr.mxu0 0.0
      %327 = vmatpush1.msra.mxu0 %v289
      %328 = vmatprep.subr.mxu0 0.0
      %329 = vmatpush1.msra.mxu0 %v290
      %330 = vmatprep.subr.mxu0 0.0
      %331 = vmatpush1.msra.mxu0 0.0
      %332 = vmatprep.subr.mxu0 0.0
      %333 = vmatpush1.msra.mxu0 0.0
      %334 = vmatprep.subr.mxu0 0.0
      %335 = vmatpush1.msra.mxu0 0.0
      %336 = vmatprep.subr.mxu0 0.0
      %337 = vmatpush1.msra.mxu0 0.0
      %338 = vmatprep.subr.mxu0 0.0
      %339 = vmatpush1.msra.mxu0 0.0
      %340 = vmatprep.subr.mxu0 0.0
      %341 = vmatpush1.msra.mxu0 0.0
      %342 = vmatprep.subr.mxu0 0.0
      %343 = vmatpush1.msra.mxu0 0.0
      %344 = vmatprep.subr.mxu0 0.0
      %345 = vmatpush1.msra.mxu0 0.0
      %346 = vmatprep.subr.mxu0 0.0
      %347 = vmatpush1.msra.mxu0 0.0
      %348 = vmatprep.subr.mxu0 0.0
      %349 = vmatpush1.msra.mxu0 0.0
      %350 = vmatprep.subr.mxu0 0.0
      %351 = vmatpush1.msra.mxu0 0.0
      %352 = vmatprep.subr.mxu0 0.0
      %353 = vmatpush1.msra.mxu0 0.0
      %354 = vmatprep.subr.mxu0 0.0
      %355 = vmatpush1.msra.mxu0 0.0
      %356 = vmatprep.subr.mxu0 0.0
      %357 = vmatpush1.msra.mxu0 0.0
      %358 = vmatprep.subr.mxu0 0.0
      %359 = vmatpush1.msra.mxu0 0.0
      %360 = vmatprep.subr.mxu0 0.0
      %361 = vmatpush1.msra.mxu0 0.0
      %362 = vmatprep.mubr.f32.mxu0 0.0
      %363 = vmatmul.mubr.f32.gmra.mrb[0].mxu0 %v274
      %v364 = vpop.f32.mrb[0].mxu0
      %v365 = vadd.f32 %v296, %v364
      %v366 = vpop.f32.mrb[0].mxu0
      %367 = vdwg.mxu0
      %v368 = vxor.u32 %v365, 2147483648
      %v369 = vmul.f32 %v368, 1.442695
      %v370 = vpow.pop %v369
      %v371 = vadd.f32 %v370, 1.0
      %v372 = vrcp.pop %v371
      %v373 = vmul.f32 1.0, %v372
      %v374 = vmul.f32 %v365, %v373
      %v375 = vld [vmem:[%s3] sm:$0xff]
      %v376 = vld [vmem:[%s3 + $0x8] sm:$0xff]
      %v377 = vld [vmem:[%s3 + $0x10] sm:$0xff]
      %v378 = vld [vmem:[%s3 + $0x18] sm:$0xff]
      %v379 = vld [vmem:[%s3 + $0x20] sm:$0xff]
      %v380 = vld [vmem:[%s3 + $0x28] sm:$0xff]
      %v381 = vld [vmem:[%s3 + $0x30] sm:$0xff]
      %v382 = vld [vmem:[%s3 + $0x38] sm:$0xff]
      %v383 = vld [vmem:[%s3 + $0x40] sm:$0xff]
      %v384 = vld [vmem:[%s3 + $0x48] sm:$0xff]
      %v385 = vld [vmem:[%s3 + $0x50] sm:$0xff]
      %v386 = vld [vmem:[%s3 + $0x58] sm:$0xff]
      %v387 = vld [vmem:[%s3 + $0x60] sm:$0xff]
      %v388 = vld [vmem:[%s3 + $0x68] sm:$0xff]
      %v389 = vld [vmem:[%s3 + $0x70] sm:$0xff]
      %v390 = vld [vmem:[%s3 + $0x78] sm:$0xff]
      %v391 = vld [vmem:[%s4] sm:$0x1]
      %v393 = vlaneseq
      %v394 = vshrl.u32 %v393, 7
      %v395 = vsub.s32 0, %v394
      %v396 = vrot.slane %v391, %v395
      %398 = vmatprep.subr.mxu0 0.0
      %399 = vmatpush1.msra.mxu0 %v375
      %400 = vmatprep.subr.mxu0 0.0
      %401 = vmatpush1.msra.mxu0 %v376
      %402 = vmatprep.subr.mxu0 0.0
      %403 = vmatpush1.msra.mxu0 %v377
      %404 = vmatprep.subr.mxu0 0.0
      %405 = vmatpush1.msra.mxu0 %v378
      %406 = vmatprep.subr.mxu0 0.0
      %407 = vmatpush1.msra.mxu0 %v379
      %408 = vmatprep.subr.mxu0 0.0
      %409 = vmatpush1.msra.mxu0 %v380
      %410 = vmatprep.subr.mxu0 0.0
      %411 = vmatpush1.msra.mxu0 %v381
      %412 = vmatprep.subr.mxu0 0.0
      %413 = vmatpush1.msra.mxu0 %v382
      %414 = vmatprep.subr.mxu0 0.0
      %415 = vmatpush1.msra.mxu0 %v383
      %416 = vmatprep.subr.mxu0 0.0
      %417 = vmatpush1.msra.mxu0 %v384
      %418 = vmatprep.subr.mxu0 0.0
      %419 = vmatpush1.msra.mxu0 %v385
      %420 = vmatprep.subr.mxu0 0.0
      %421 = vmatpush1.msra.mxu0 %v386
      %422 = vmatprep.subr.mxu0 0.0
      %423 = vmatpush1.msra.mxu0 %v387
      %424 = vmatprep.subr.mxu0 0.0
      %425 = vmatpush1.msra.mxu0 %v388
      %426 = vmatprep.subr.mxu0 0.0
      %427 = vmatpush1.msra.mxu0 %v389
      %428 = vmatprep.subr.mxu0 0.0
      %429 = vmatpush1.msra.mxu0 %v390
      %430 = vmatprep.subr.mxu0 0.0
      %431 = vmatpush1.msra.mxu0 0.0
      %432 = vmatprep.subr.mxu0 0.0
      %433 = vmatpush1.msra.mxu0 0.0
      %434 = vmatprep.subr.mxu0 0.0
      %435 = vmatpush1.msra.mxu0 0.0
      %436 = vmatprep.subr.mxu0 0.0
      %437 = vmatpush1.msra.mxu0 0.0
      %438 = vmatprep.subr.mxu0 0.0
      %439 = vmatpush1.msra.mxu0 0.0
      %440 = vmatprep.subr.mxu0 0.0
      %441 = vmatpush1.msra.mxu0 0.0
      %442 = vmatprep.subr.mxu0 0.0
      %443 = vmatpush1.msra.mxu0 0.0
      %444 = vmatprep.subr.mxu0 0.0
      %445 = vmatpush1.msra.mxu0 0.0
      %446 = vmatprep.subr.mxu0 0.0
      %447 = vmatpush1.msra.mxu0 0.0
      %448 = vmatprep.subr.mxu0 0.0
      %449 = vmatpush1.msra.mxu0 0.0
      %450 = vmatprep.subr.mxu0 0.0
      %451 = vmatpush1.msra.mxu0 0.0
      %452 = vmatprep.subr.mxu0 0.0
      %453 = vmatpush1.msra.mxu0 0.0
      %454 = vmatprep.subr.mxu0 0.0
      %455 = vmatpush1.msra.mxu0 0.0
      %456 = vmatprep.subr.mxu0 0.0
      %457 = vmatpush1.msra.mxu0 0.0
      %458 = vmatprep.subr.mxu0 0.0
      %459 = vmatpush1.msra.mxu0 0.0
      %460 = vmatprep.subr.mxu0 0.0
      %461 = vmatpush1.msra.mxu0 0.0
      %462 = vmatprep.mubr.f32.mxu0 0.0
      %463 = vmatmul.mubr.f32.gmra.mrb[0].mxu0 %v374
      %v464 = vpop.f32.mrb[0].mxu0
      %v465 = vadd.f32 %v396, %v464
      %v466 = vpop.f32.mrb[0].mxu0
      %467 = vdwg.mxu0
      %v468 = vxor.u32 %v465, 2147483648
      %v469 = vmul.f32 %v468, 1.442695
      %v470 = vpow.pop %v469
      %v471 = vadd.f32 %v470, 1.0
      %v472 = vrcp.pop %v471
      %v473 = vmul.f32 1.0, %v472
      %v474 = vmul.f32 %v465, %v473
      %v475 = vld [vmem:[%s5] sm:$0xff]
      %v476 = vld [vmem:[%s5 + $0x8] sm:$0xff]
      %v477 = vld [vmem:[%s5 + $0x10] sm:$0xff]
      %v478 = vld [vmem:[%s5 + $0x18] sm:$0xff]
      %v479 = vld [vmem:[%s5 + $0x20] sm:$0xff]
      %v480 = vld [vmem:[%s5 + $0x28] sm:$0xff]
      %v481 = vld [vmem:[%s5 + $0x30] sm:$0xff]
      %v482 = vld [vmem:[%s5 + $0x38] sm:$0xff]
      %v483 = vld [vmem:[%s5 + $0x40] sm:$0xff]
      %v484 = vld [vmem:[%s5 + $0x48] sm:$0xff]
      %v485 = vld [vmem:[%s5 + $0x50] sm:$0xff]
      %v486 = vld [vmem:[%s5 + $0x58] sm:$0xff]
      %v487 = vld [vmem:[%s5 + $0x60] sm:$0xff]
      %v488 = vld [vmem:[%s5 + $0x68] sm:$0xff]
      %v489 = vld [vmem:[%s5 + $0x70] sm:$0xff]
      %v490 = vld [vmem:[%s5 + $0x78] sm:$0xff]
      %v491 = vld [vmem:[%s6] sm:$0x1]
      %v493 = vlaneseq
      %v494 = vshrl.u32 %v493, 7
      %v495 = vsub.s32 0, %v494
      %v496 = vrot.slane %v491, %v495
      %498 = vmatprep.subr.mxu0 0.0
      %499 = vmatpush1.msra.mxu0 %v475
      %500 = vmatprep.subr.mxu0 0.0
      %501 = vmatpush1.msra.mxu0 %v476
      %502 = vmatprep.subr.mxu0 0.0
      %503 = vmatpush1.msra.mxu0 %v477
      %504 = vmatprep.subr.mxu0 0.0
      %505 = vmatpush1.msra.mxu0 %v478
      %506 = vmatprep.subr.mxu0 0.0
      %507 = vmatpush1.msra.mxu0 %v479
      %508 = vmatprep.subr.mxu0 0.0
      %509 = vmatpush1.msra.mxu0 %v480
      %510 = vmatprep.subr.mxu0 0.0
      %511 = vmatpush1.msra.mxu0 %v481
      %512 = vmatprep.subr.mxu0 0.0
      %513 = vmatpush1.msra.mxu0 %v482
      %514 = vmatprep.subr.mxu0 0.0
      %515 = vmatpush1.msra.mxu0 %v483
      %516 = vmatprep.subr.mxu0 0.0
      %517 = vmatpush1.msra.mxu0 %v484
      %518 = vmatprep.subr.mxu0 0.0
      %519 = vmatpush1.msra.mxu0 %v485
      %520 = vmatprep.subr.mxu0 0.0
      %521 = vmatpush1.msra.mxu0 %v486
      %522 = vmatprep.subr.mxu0 0.0
      %523 = vmatpush1.msra.mxu0 %v487
      %524 = vmatprep.subr.mxu0 0.0
      %525 = vmatpush1.msra.mxu0 %v488
      %526 = vmatprep.subr.mxu0 0.0
      %527 = vmatpush1.msra.mxu0 %v489
      %528 = vmatprep.subr.mxu0 0.0
      %529 = vmatpush1.msra.mxu0 %v490
      %530 = vmatprep.subr.mxu0 0.0
      %531 = vmatpush1.msra.mxu0 0.0
      %532 = vmatprep.subr.mxu0 0.0
      %533 = vmatpush1.msra.mxu0 0.0
      %534 = vmatprep.subr.mxu0 0.0
      %535 = vmatpush1.msra.mxu0 0.0
      %536 = vmatprep.subr.mxu0 0.0
      %537 = vmatpush1.msra.mxu0 0.0
      %538 = vmatprep.subr.mxu0 0.0
      %539 = vmatpush1.msra.mxu0 0.0
      %540 = vmatprep.subr.mxu0 0.0
      %541 = vmatpush1.msra.mxu0 0.0
      %542 = vmatprep.subr.mxu0 0.0
      %543 = vmatpush1.msra.mxu0 0.0
      %544 = vmatprep.subr.mxu0 0.0
      %545 = vmatpush1.msra.mxu0 0.0
      %546 = vmatprep.subr.mxu0 0.0
      %547 = vmatpush1.msra.mxu0 0.0
      %548 = vmatprep.subr.mxu0 0.0
      %549 = vmatpush1.msra.mxu0 0.0
      %550 = vmatprep.subr.mxu0 0.0
      %551 = vmatpush1.msra.mxu0 0.0
      %552 = vmatprep.subr.mxu0 0.0
      %553 = vmatpush1.msra.mxu0 0.0
      %554 = vmatprep.subr.mxu0 0.0
      %555 = vmatpush1.msra.mxu0 0.0
      %556 = vmatprep.subr.mxu0 0.0
      %557 = vmatpush1.msra.mxu0 0.0
      %558 = vmatprep.subr.mxu0 0.0
      %559 = vmatpush1.msra.mxu0 0.0
      %560 = vmatprep.subr.mxu0 0.0
      %561 = vmatpush1.msra.mxu0 0.0
      %562 = vmatprep.mubr.f32.mxu0 0.0
      %563 = vmatmul.mubr.f32.gmra.mrb[0].mxu0 %v474
      %v564 = vpop.f32.mrb[0].mxu0
      %v565 = vadd.f32 %v496, %v564
      %v566 = vpop.f32.mrb[0].mxu0
      %567 = vdwg.mxu0
      %568 = vst [vmem:[%s273] sm:$0xff] %v565
      %p569 = scmp.lt.s32.totalorder %s18, 1
      %s570 = scalar_select %p569, %s18, 1
      %s571 = smul.addr %s570, 8
      %s572 = scalar_lea.vmem %s7, %s571
      // Predicated region
      $region49: #{mlp_pallas.1} parent=47 // pred_check
        %p573 = pneg %p188
      $region50: #{mlp_pallas.1} parent=47 // pred_check_branch
        %575 = sbr.rel (%p573) target = $region52
      $region51: #{mlp_pallas.1} parent=47 // pred_region
        _
      $region52: #{mlp_pallas.1} parent=47 // pred_fallthru
        _
    $region48: #{mlp_pallas.1} parent=5 // pred_fallthru
      _
    %p576 = scmp.le.s32.totalorder 2, %s13
    // Predicated region
    $region53: #{mlp_pallas.1} parent=5 // pred_check
      %p577 = pneg %p576
    $region54: #{mlp_pallas.1} parent=5 // pred_check_branch
      %579 = sbr.rel (%p577) target = $region56
    $region55: #{mlp_pallas.1} parent=5 // pred_region
      %s580 = ssub.s32 %s13, 2
      // Predicated region
      $region57: #{mlp_pallas.1} parent=55 // pred_check
        %p581 = pneg %p194
      $region58: #{mlp_pallas.1} parent=55 // pred_check_branch
        %583 = sbr.rel (%p581) target = $region60
      $region59: #{mlp_pallas.1} parent=55 // pred_region
        %p584 = scmp.lt.s32.totalorder %s19, 1
        %s585 = scalar_select %p584, %s19, 1
        %s586 = smul.addr %s585, 8
        %s587 = scalar_lea.vmem %s7, %s586
      $region60: #{mlp_pallas.1} parent=55 // pred_fallthru
        _
    $region56: #{mlp_pallas.1} parent=5 // pred_fallthru
      _
  $region6: #{mlp_pallas.1} parent=0 // loop_footer
    %s17 = sadd.s32 1, %s13
  $region7: #{mlp_pallas.1} parent=0 // loop_footer_branch
    %12 = sbr.rel target = $region3
  $region8: #{mlp_pallas.1} parent=0 // loop_exit
    _

</llo_original>
